<compile_context>
chip_gen: v5e
topology: v5e:2x2
jax: 0.10.0
libtpu: 0.0.40
codegen_flags: <defaults>
</compile_context>

<pallas_src>
import jax
import jax.numpy as jnp
import numpy as np
from jax.experimental import pallas as pl
from jax.experimental.pallas import tpu as pltpu

IGNORE = 255


def _consistency_kernel(parsing_ref, edge_ref, label_ref, loss_ref, count_ref,
                        bestv_ref, besti_ref):
    _, C_TILE, H, W = parsing_ref.shape
    CE = edge_ref.shape[1]
    c_blk = pl.program_id(1)
    n_cblk = pl.num_programs(1)

    # ---------------- running argmax over parsing channels -------------------
    @pl.when(c_blk == 0)
    def _init():
        bestv_ref[...] = jnp.full((H, W), -jnp.inf, jnp.float32)
        besti_ref[...] = jnp.zeros((H, W), jnp.int32)

    best_v = bestv_ref[...]
    best_i = besti_ref[...]
    for lc in range(C_TILE):  # static, small unroll
        v = parsing_ref[0, lc].astype(jnp.float32)   # single upcast per tile
        gt = v > best_v                              # strict > => first-max-wins
        best_i = jnp.where(gt, c_blk * C_TILE + lc, best_i)
        best_v = jnp.where(gt, v, best_v)
    bestv_ref[...] = best_v
    besti_ref[...] = best_i

    # --------------- spatial work only on the last channel block -------------
    @pl.when(c_blk == n_cblk - 1)
    def _finish():
        lab = label_ref[0].astype(jnp.int32)
        ppre = jnp.where(lab == IGNORE, jnp.int32(IGNORE), best_i)

        row = jax.lax.broadcasted_iota(jnp.int32, (H, W), 0)
        col = jax.lax.broadcasted_iota(jnp.int32, (H, W), 1)
        not_top = row >= 1
        not_bot = row <= H - 2
        not_left = col >= 1
        not_right = col <= W - 2

        def shift(x, dy, dx):
            # y[i, j] = x[i + dy, j + dx]  (wrap-around; callers mask edges)
            y = x
            sy = (-dy) % H
            if sy:
                y = pltpu.roll(y, sy, axis=0)
            sx = (-dx) % W
            if sx:
                y = pltpu.roll(y, sx, axis=1)
            return y

        def neq_valid(a, b):
            return (a != b) & (a != IGNORE) & (b != IGNORE)

        # raw boundary map (the four directional comparisons of the reference)
        e = neq_valid(ppre, shift(ppre, -1, 0)) & not_top                 # edge_right
        e = e | (neq_valid(ppre, shift(ppre, 0, 1)) & not_right)          # edge_up
        e = e | (neq_valid(ppre, shift(ppre, 1, 1)) & not_bot & not_right)   # edge_upright
        e = e | (neq_valid(ppre, shift(ppre, 1, -1)) & not_bot & not_left)   # edge_bottomright
        e_i = e.astype(jnp.int32)

        # 3x3 ones-conv (padding=1) + binarization == dilation; separable form
        vert = e_i
        vert = jnp.maximum(vert, jnp.where(not_top, shift(e_i, -1, 0), 0))
        vert = jnp.maximum(vert, jnp.where(not_bot, shift(e_i, 1, 0), 0))
        dil = vert
        dil = jnp.maximum(dil, jnp.where(not_left, shift(vert, 0, -1), 0))
        dil = jnp.maximum(dil, jnp.where(not_right, shift(vert, 0, 1), 0))
        gen_pos = dil > 0

        # edge argmax > 0  <=>  max over channels >= 1 strictly beats channel 0
        if CE > 1:
            emax = edge_ref[0, 1]
            for c in range(2, CE):
                emax = jnp.maximum(emax, edge_ref[0, c])
            pre_pos = emax > edge_ref[0, 0]
        else:
            pre_pos = jnp.zeros((H, W), jnp.bool_)

        valid = lab != IGNORE
        positive = valid & gen_pos & pre_pos

        # smooth-L1 term; on the positive set both operands are exactly 1.0,
        # so this is analytically 0 — kept (once per image, negligible) to stay
        # transparently faithful to the PyTorch module.
        gen_f = gen_pos.astype(jnp.float32)
        pre_f = pre_pos.astype(jnp.float32)
        diff = gen_f - pre_f
        adiff = jnp.abs(diff)
        elem = jnp.where(adiff < 1.0, 0.5 * diff * diff, adiff - 0.5)

        loss_row = jnp.sum(jnp.where(positive, elem, 0.0), axis=0, keepdims=True)
        count_row = jnp.sum(positive.astype(jnp.float32), axis=0, keepdims=True)
        loss_ref[...] = loss_row.reshape(1, 1, W)
        count_ref[...] = count_row.reshape(1, 1, W)


def _largest_divisor_leq(n, m):
    for d in range(min(n, m), 0, -1):
        if n % d == 0:
            return d
    return 1


def consistency_loss(parsing, edge_logits, label, *, c_tile=None,
                     return_count=False):
    """Pallas implementation of ConsistencyLoss.forward."""
    N, CP, H, W = parsing.shape
    CE = edge_logits.shape[1]
    label = label.astype(jnp.int32)

    if c_tile is None:
        c_tile = _largest_divisor_leq(CP, 8)
    assert CP % c_tile == 0, "c_tile must divide the parsing channel count"
    n_cblk = CP // c_tile

    loss_part, count_part = pl.pallas_call(
        _consistency_kernel,
        grid=(N, n_cblk),
        in_specs=[
            # parsing: tiled over batch and channel blocks (pipelined DMAs)
            pl.BlockSpec((1, c_tile, H, W), lambda n, c: (n, c, 0, 0)),
            # edge / label: constant block index across the channel axis
            # => fetched once per image, resident for all channel steps
            pl.BlockSpec((1, CE, H, W), lambda n, c: (n, 0, 0, 0)),
            pl.BlockSpec((1, H, W), lambda n, c: (n, 0, 0)),
        ],
        out_specs=[
            pl.BlockSpec((1, 1, W), lambda n, c: (n, 0, 0)),
            pl.BlockSpec((1, 1, W), lambda n, c: (n, 0, 0)),
        ],
        out_shape=[
            jax.ShapeDtypeStruct((N, 1, W), jnp.float32),
            jax.ShapeDtypeStruct((N, 1, W), jnp.float32),
        ],
        scratch_shapes=[
            pltpu.VMEM((H, W), jnp.float32),   # running argmax value
            pltpu.VMEM((H, W), jnp.int32),     # running argmax index
        ],
        compiler_params=pltpu.CompilerParams(
            dimension_semantics=("parallel", "arbitrary"),
            vmem_limit_bytes=32 * 1024 * 1024,
        ),
    )(parsing, edge_logits, label)

    total = jnp.sum(loss_part)
    count = jnp.sum(count_part)
    # mean over selected elements; NaN if positive_union is empty (matches
    # torch smooth_l1_loss on empty tensors).
    loss = total / count
    if return_count:
        return loss, count
    return loss


# ---------------------------- pure-JAX reference -----------------------------
def reference_loss(parsing, edge_logits, label):
    label = label.astype(jnp.int32)
    ppre = jnp.argmax(parsing, axis=1).astype(jnp.int32)
    ppre = jnp.where(label == IGNORE, IGNORE, ppre)

    def nv(a, b):
        return (a != b) & (a != IGNORE) & (b != IGNORE)

    n, h, w = ppre.shape
    e = jnp.zeros((n, h, w), bool)
    e = e.at[:, 1:, :].set(e[:, 1:, :] | nv(ppre[:, 1:, :], ppre[:, :-1, :]))
    e = e.at[:, :, :-1].set(e[:, :, :-1] | nv(ppre[:, :, :-1], ppre[:, :, 1:]))
    e = e.at[:, :-1, :-1].set(e[:, :-1, :-1] | nv(ppre[:, :-1, :-1], ppre[:, 1:, 1:]))
    e = e.at[:, :-1, 1:].set(e[:, :-1, 1:] | nv(ppre[:, :-1, 1:], ppre[:, 1:, :-1]))
    ef = e.astype(jnp.float32)

    dil = jax.lax.conv_general_dilated(
        ef[:, None], jnp.ones((1, 1, 3, 3), jnp.float32), (1, 1), "SAME",
        dimension_numbers=("NCHW", "OIHW", "NCHW"))[:, 0]
    gen = (dil != 0).astype(jnp.float32)

    epre = jnp.argmax(edge_logits, axis=1)
    epre_f = jnp.where(epre > 0, 1, epre).astype(jnp.float32)

    valid = label != IGNORE
    pos = valid & (gen == 1.0) & (epre_f == 1.0)
    diff = gen - epre_f
    elem = jnp.where(jnp.abs(diff) < 1.0, 0.5 * diff * diff, jnp.abs(diff) - 0.5)
    count = jnp.sum(pos.astype(jnp.float32))
    return jnp.sum(jnp.where(pos, elem, 0.0)) / count, count


if __name__ == "__main__":
    key = jax.random.PRNGKey(0)
    ks = jax.random.split(key, 8)
    N, H, W = 2, 16, 16

    # case 1: f32 logits, CP=4 (single channel block), CE=2
    CP1, CE1 = 4, 2
    parsing1 = jax.random.normal(ks[0], (N, CP1, H, W), jnp.float32)
    edge1 = jax.random.normal(ks[1], (N, CE1, H, W), jnp.float32)
    label1 = jax.random.randint(ks[2], (N, H, W), 0, CP1).astype(jnp.int32)
    label1 = jnp.where(jax.random.uniform(ks[3], (N, H, W)) < 0.1, IGNORE, label1)

    # case 2: native bf16 logits, CP=6 tiled as 3 channel blocks, CE=3
    CP2, CE2 = 6, 3
    parsing2 = jax.random.normal(ks[4], (N, CP2, H, W), jnp.float32).astype(jnp.bfloat16)
    edge2 = jax.random.normal(ks[5], (N, CE2, H, W), jnp.float32).astype(jnp.bfloat16)
    label2 = jax.random.randint(ks[6], (N, H, W), 0, CP2).astype(jnp.int32)
    label2 = jnp.where(jax.random.uniform(ks[7], (N, H, W)) < 0.1, IGNORE, label2)

    cases = [
        (parsing1, edge1, label1, None),
        (parsing2, edge2, label2, 2),
    ]
    for parsing, edge_logits, label, ctile in cases:
        loss, count = consistency_loss(parsing, edge_logits, label,
                                       c_tile=ctile, return_count=True)
        jax.block_until_ready((loss, count))
        ref_loss, ref_count = reference_loss(parsing, edge_logits, label)

        assert abs(float(count) - float(ref_count)) < 0.5, (count, ref_count)
        lv, rv = float(loss), float(ref_loss)
        ok = (np.isnan(lv) and np.isnan(rv)) or abs(lv - rv) < 1e-6
        assert ok, (lv, rv)

    print("KERNEL_OK")
</pallas_src>

<mosaic_0001>
module attributes {stable_mosaic.version = 11 : i64} {
  func.func @_consistency_kernel(%arg0: i32, %arg1: i32, %arg2: memref<1x4x16x16xf32, #tpu.memory_space<vmem>>, %arg3: memref<1x2x16x16xf32, #tpu.memory_space<vmem>>, %arg4: memref<1x16x16xi32, #tpu.memory_space<vmem>>, %arg5: memref<1x1x16xf32, #tpu.memory_space<vmem>>, %arg6: memref<1x1x16xf32, #tpu.memory_space<vmem>>, %arg7: memref<16x16xf32, #tpu.memory_space<vmem>>, %arg8: memref<16x16xi32, #tpu.memory_space<vmem>>) attributes {dimension_semantics = [#tpu.dimension_semantics<parallel>, #tpu.dimension_semantics<arbitrary>], iteration_bounds = array<i64: 2, 1>, scalar_prefetch = 0 : i64, scratch_operands = 2 : i64, tpu.core_type = #tpu.core_type<tc>, window_params = [{transform_indices = @transform_0, window_bounds = array<i64: 1, 4, 16, 16>}, {transform_indices = @transform_1, window_bounds = array<i64: 1, 2, 16, 16>}, {transform_indices = @transform_2, window_bounds = array<i64: 1, 16, 16>}, {transform_indices = @transform_3, window_bounds = array<i64: 1, 1, 16>}, {transform_indices = @transform_4, window_bounds = array<i64: 1, 1, 16>}]} {
    %c0_i32 = arith.constant 0 : i32
    %0 = arith.cmpi eq, %arg1, %c0_i32 : i32
    %1 = arith.extui %0 : i1 to i32
    %c0_i32_0 = arith.constant 0 : i32
    %2 = arith.cmpi ne, %1, %c0_i32_0 : i32
    scf.if %2 {
      %cst = arith.constant 0xFF800000 : f32
      %42 = vector.broadcast %cst : f32 to vector<16x16xf32>
      %c0_27 = arith.constant 0 : index
      %c0_28 = arith.constant 0 : index
      %43 = vector.load %arg7[%c0_27, %c0_28] : memref<16x16xf32, #tpu.memory_space<vmem>>, vector<16x16xf32>
      tpu.vector_store %arg7[%c0_27, %c0_28], %42 {strides = array<i32>} : memref<16x16xf32, #tpu.memory_space<vmem>>, vector<16x16xf32>,
      %c0_i32_29 = arith.constant 0 : i32
      %44 = vector.broadcast %c0_i32_29 : i32 to vector<16x16xi32>
      %c0_30 = arith.constant 0 : index
      %c0_31 = arith.constant 0 : index
      %45 = vector.load %arg8[%c0_30, %c0_31] : memref<16x16xi32, #tpu.memory_space<vmem>>, vector<16x16xi32>
      tpu.vector_store %arg8[%c0_30, %c0_31], %44 {strides = array<i32>} : memref<16x16xi32, #tpu.memory_space<vmem>>, vector<16x16xi32>,
    } else {
    }
    %c0 = arith.constant 0 : index
    %c0_1 = arith.constant 0 : index
    %3 = vector.load %arg7[%c0, %c0_1] : memref<16x16xf32, #tpu.memory_space<vmem>>, vector<16x16xf32>
    %c0_2 = arith.constant 0 : index
    %c0_3 = arith.constant 0 : index
    %4 = vector.load %arg8[%c0_2, %c0_3] : memref<16x16xi32, #tpu.memory_space<vmem>>, vector<16x16xi32>
    %c0_4 = arith.constant 0 : index
    %c0_5 = arith.constant 0 : index
    %c0_6 = arith.constant 0 : index
    %c0_7 = arith.constant 0 : index
    %5 = vector.load %arg2[%c0_4, %c0_5, %c0_6, %c0_7] : memref<1x4x16x16xf32, #tpu.memory_space<vmem>>, vector<1x1x16x16xf32>
    %6 = vector.shape_cast %5 : vector<1x1x16x16xf32> to vector<16x16xf32>
    %7 = arith.cmpf ogt, %6, %3 : vector<16x16xf32>
    %c4_i32 = arith.constant 4 : i32
    %8 = arith.muli %arg1, %c4_i32 : i32
    %c0_i32_8 = arith.constant 0 : i32
    %9 = arith.addi %8, %c0_i32_8 : i32
    %10 = vector.broadcast %9 : i32 to vector<16x16xi32>
    %11 = arith.select %7, %10, %4 : vector<16x16xi1>, vector<16x16xi32>
    %12 = arith.select %7, %6, %3 : vector<16x16xi1>, vector<16x16xf32>
    %c0_9 = arith.constant 0 : index
    %c1 = arith.constant 1 : index
    %c0_10 = arith.constant 0 : index
    %c0_11 = arith.constant 0 : index
    %13 = vector.load %arg2[%c0_9, %c1, %c0_10, %c0_11] : memref<1x4x16x16xf32, #tpu.memory_space<vmem>>, vector<1x1x16x16xf32>
    %14 = vector.shape_cast %13 : vector<1x1x16x16xf32> to vector<16x16xf32>
    %15 = arith.cmpf ogt, %14, %12 : vector<16x16xf32>
    %c4_i32_12 = arith.constant 4 : i32
    %16 = arith.muli %arg1, %c4_i32_12 : i32
    %c1_i32 = arith.constant 1 : i32
    %17 = arith.addi %16, %c1_i32 : i32
    %18 = vector.broadcast %17 : i32 to vector<16x16xi32>
    %19 = arith.select %15, %18, %11 : vector<16x16xi1>, vector<16x16xi32>
    %20 = arith.select %15, %14, %12 : vector<16x16xi1>, vector<16x16xf32>
    %c0_13 = arith.constant 0 : index
    %c2 = arith.constant 2 : index
    %c0_14 = arith.constant 0 : index
    %c0_15 = arith.constant 0 : index
    %21 = vector.load %arg2[%c0_13, %c2, %c0_14, %c0_15] : memref<1x4x16x16xf32, #tpu.memory_space<vmem>>, vector<1x1x16x16xf32>
    %22 = vector.shape_cast %21 : vector<1x1x16x16xf32> to vector<16x16xf32>
    %23 = arith.cmpf ogt, %22, %20 : vector<16x16xf32>
    %c4_i32_16 = arith.constant 4 : i32
    %24 = arith.muli %arg1, %c4_i32_16 : i32
    %c2_i32 = arith.constant 2 : i32
    %25 = arith.addi %24, %c2_i32 : i32
    %26 = vector.broadcast %25 : i32 to vector<16x16xi32>
    %27 = arith.select %23, %26, %19 : vector<16x16xi1>, vector<16x16xi32>
    %28 = arith.select %23, %22, %20 : vector<16x16xi1>, vector<16x16xf32>
    %c0_17 = arith.constant 0 : index
    %c3 = arith.constant 3 : index
    %c0_18 = arith.constant 0 : index
    %c0_19 = arith.constant 0 : index
    %29 = vector.load %arg2[%c0_17, %c3, %c0_18, %c0_19] : memref<1x4x16x16xf32, #tpu.memory_space<vmem>>, vector<1x1x16x16xf32>
    %30 = vector.shape_cast %29 : vector<1x1x16x16xf32> to vector<16x16xf32>
    %31 = arith.cmpf ogt, %30, %28 : vector<16x16xf32>
    %c4_i32_20 = arith.constant 4 : i32
    %32 = arith.muli %arg1, %c4_i32_20 : i32
    %c3_i32 = arith.constant 3 : i32
    %33 = arith.addi %32, %c3_i32 : i32
    %34 = vector.broadcast %33 : i32 to vector<16x16xi32>
    %35 = arith.select %31, %34, %27 : vector<16x16xi1>, vector<16x16xi32>
    %36 = arith.select %31, %30, %28 : vector<16x16xi1>, vector<16x16xf32>
    %c0_21 = arith.constant 0 : index
    %c0_22 = arith.constant 0 : index
    %37 = vector.load %arg7[%c0_21, %c0_22] : memref<16x16xf32, #tpu.memory_space<vmem>>, vector<16x16xf32>
    tpu.vector_store %arg7[%c0_21, %c0_22], %36 {strides = array<i32>} : memref<16x16xf32, #tpu.memory_space<vmem>>, vector<16x16xf32>,
    %c0_23 = arith.constant 0 : index
    %c0_24 = arith.constant 0 : index
    %38 = vector.load %arg8[%c0_23, %c0_24] : memref<16x16xi32, #tpu.memory_space<vmem>>, vector<16x16xi32>
    tpu.vector_store %arg8[%c0_23, %c0_24], %35 {strides = array<i32>} : memref<16x16xi32, #tpu.memory_space<vmem>>, vector<16x16xi32>,
    %c0_i32_25 = arith.constant 0 : i32
    %39 = arith.cmpi eq, %arg1, %c0_i32_25 : i32
    %40 = arith.extui %39 : i1 to i32
    %c0_i32_26 = arith.constant 0 : i32
    %41 = arith.cmpi ne, %40, %c0_i32_26 : i32
    scf.if %41 {
      %c0_27 = arith.constant 0 : index
      %c0_28 = arith.constant 0 : index
      %c0_29 = arith.constant 0 : index
      %42 = vector.load %arg4[%c0_27, %c0_28, %c0_29] : memref<1x16x16xi32, #tpu.memory_space<vmem>>, vector<1x16x16xi32>
      %43 = vector.shape_cast %42 : vector<1x16x16xi32> to vector<16x16xi32>
      %c255_i32 = arith.constant 255 : i32
      %44 = vector.broadcast %c255_i32 : i32 to vector<16x16xi32>
      %45 = arith.cmpi eq, %43, %44 : vector<16x16xi32>
      %c255_i32_30 = arith.constant 255 : i32
      %46 = vector.broadcast %c255_i32_30 : i32 to vector<16x16xi32>
      %47 = arith.select %45, %46, %35 : vector<16x16xi1>, vector<16x16xi32>
      %48 = tpu.iota {dimensions = array<i32: 0>} : vector<16x16xi32>
      %49 = tpu.iota {dimensions = array<i32: 1>} : vector<16x16xi32>
      %c1_i32_31 = arith.constant 1 : i32
      %50 = vector.broadcast %c1_i32_31 : i32 to vector<16x16xi32>
      %51 = arith.cmpi sge, %48, %50 : vector<16x16xi32>
      %c14_i32 = arith.constant 14 : i32
      %52 = vector.broadcast %c14_i32 : i32 to vector<16x16xi32>
      %53 = arith.cmpi sle, %48, %52 : vector<16x16xi32>
      %c1_i32_32 = arith.constant 1 : i32
      %54 = vector.broadcast %c1_i32_32 : i32 to vector<16x16xi32>
      %55 = arith.cmpi sge, %49, %54 : vector<16x16xi32>
      %c14_i32_33 = arith.constant 14 : i32
      %56 = vector.broadcast %c14_i32_33 : i32 to vector<16x16xi32>
      %57 = arith.cmpi sle, %49, %56 : vector<16x16xi32>
      %c1_i32_34 = arith.constant 1 : i32
      %58 = tpu.dynamic_rotate %47 by %c1_i32_34 dim 0 : vector<16x16xi32>, i32 -> vector<16x16xi32>
      %59 = arith.cmpi ne, %47, %58 : vector<16x16xi32>
      %c255_i32_35 = arith.constant 255 : i32
      %60 = vector.broadcast %c255_i32_35 : i32 to vector<16x16xi32>
      %61 = arith.cmpi ne, %47, %60 : vector<16x16xi32>
      %62 = arith.andi %59, %61 : vector<16x16xi1>
      %c255_i32_36 = arith.constant 255 : i32
      %63 = vector.broadcast %c255_i32_36 : i32 to vector<16x16xi32>
      %64 = arith.cmpi ne, %58, %63 : vector<16x16xi32>
      %65 = arith.andi %62, %64 : vector<16x16xi1>
      %66 = arith.andi %65, %51 : vector<16x16xi1>
      %c15_i32 = arith.constant 15 : i32
      %67 = tpu.dynamic_rotate %47 by %c15_i32 dim 1 : vector<16x16xi32>, i32 -> vector<16x16xi32>
      %68 = arith.cmpi ne, %47, %67 : vector<16x16xi32>
      %c255_i32_37 = arith.constant 255 : i32
      %69 = vector.broadcast %c255_i32_37 : i32 to vector<16x16xi32>
      %70 = arith.cmpi ne, %47, %69 : vector<16x16xi32>
      %71 = arith.andi %68, %70 : vector<16x16xi1>
      %c255_i32_38 = arith.constant 255 : i32
      %72 = vector.broadcast %c255_i32_38 : i32 to vector<16x16xi32>
      %73 = arith.cmpi ne, %67, %72 : vector<16x16xi32>
      %74 = arith.andi %71, %73 : vector<16x16xi1>
      %75 = arith.andi %74, %57 : vector<16x16xi1>
      %76 = arith.ori %66, %75 : vector<16x16xi1>
      %c15_i32_39 = arith.constant 15 : i32
      %77 = tpu.dynamic_rotate %47 by %c15_i32_39 dim 0 : vector<16x16xi32>, i32 -> vector<16x16xi32>
      %c15_i32_40 = arith.constant 15 : i32
      %78 = tpu.dynamic_rotate %77 by %c15_i32_40 dim 1 : vector<16x16xi32>, i32 -> vector<16x16xi32>
      %79 = arith.cmpi ne, %47, %78 : vector<16x16xi32>
      %c255_i32_41 = arith.constant 255 : i32
      %80 = vector.broadcast %c255_i32_41 : i32 to vector<16x16xi32>
      %81 = arith.cmpi ne, %47, %80 : vector<16x16xi32>
      %82 = arith.andi %79, %81 : vector<16x16xi1>
      %c255_i32_42 = arith.constant 255 : i32
      %83 = vector.broadcast %c255_i32_42 : i32 to vector<16x16xi32>
      %84 = arith.cmpi ne, %78, %83 : vector<16x16xi32>
      %85 = arith.andi %82, %84 : vector<16x16xi1>
      %86 = arith.andi %85, %53 : vector<16x16xi1>
      %87 = arith.andi %86, %57 : vector<16x16xi1>
      %88 = arith.ori %76, %87 : vector<16x16xi1>
      %c15_i32_43 = arith.constant 15 : i32
      %89 = tpu.dynamic_rotate %47 by %c15_i32_43 dim 0 : vector<16x16xi32>, i32 -> vector<16x16xi32>
      %c1_i32_44 = arith.constant 1 : i32
      %90 = tpu.dynamic_rotate %89 by %c1_i32_44 dim 1 : vector<16x16xi32>, i32 -> vector<16x16xi32>
      %91 = arith.cmpi ne, %47, %90 : vector<16x16xi32>
      %c255_i32_45 = arith.constant 255 : i32
      %92 = vector.broadcast %c255_i32_45 : i32 to vector<16x16xi32>
      %93 = arith.cmpi ne, %47, %92 : vector<16x16xi32>
      %94 = arith.andi %91, %93 : vector<16x16xi1>
      %c255_i32_46 = arith.constant 255 : i32
      %95 = vector.broadcast %c255_i32_46 : i32 to vector<16x16xi32>
      %96 = arith.cmpi ne, %90, %95 : vector<16x16xi32>
      %97 = arith.andi %94, %96 : vector<16x16xi1>
      %98 = arith.andi %97, %53 : vector<16x16xi1>
      %99 = arith.andi %98, %55 : vector<16x16xi1>
      %100 = arith.ori %88, %99 : vector<16x16xi1>
      %101 = arith.extui %100 : vector<16x16xi1> to vector<16x16xi32>
      %c1_i32_47 = arith.constant 1 : i32
      %102 = tpu.dynamic_rotate %101 by %c1_i32_47 dim 0 : vector<16x16xi32>, i32 -> vector<16x16xi32>
      %c0_i32_48 = arith.constant 0 : i32
      %103 = vector.broadcast %c0_i32_48 : i32 to vector<16x16xi32>
      %104 = arith.select %51, %102, %103 : vector<16x16xi1>, vector<16x16xi32>
      %105 = arith.maxsi %101, %104 : vector<16x16xi32>
      %c15_i32_49 = arith.constant 15 : i32
      %106 = tpu.dynamic_rotate %101 by %c15_i32_49 dim 0 : vector<16x16xi32>, i32 -> vector<16x16xi32>
      %c0_i32_50 = arith.constant 0 : i32
      %107 = vector.broadcast %c0_i32_50 : i32 to vector<16x16xi32>
      %108 = arith.select %53, %106, %107 : vector<16x16xi1>, vector<16x16xi32>
      %109 = arith.maxsi %105, %108 : vector<16x16xi32>
      %c1_i32_51 = arith.constant 1 : i32
      %110 = tpu.dynamic_rotate %109 by %c1_i32_51 dim 1 : vector<16x16xi32>, i32 -> vector<16x16xi32>
      %c0_i32_52 = arith.constant 0 : i32
      %111 = vector.broadcast %c0_i32_52 : i32 to vector<16x16xi32>
      %112 = arith.select %55, %110, %111 : vector<16x16xi1>, vector<16x16xi32>
      %113 = arith.maxsi %109, %112 : vector<16x16xi32>
      %c15_i32_53 = arith.constant 15 : i32
      %114 = tpu.dynamic_rotate %109 by %c15_i32_53 dim 1 : vector<16x16xi32>, i32 -> vector<16x16xi32>
      %c0_i32_54 = arith.constant 0 : i32
      %115 = vector.broadcast %c0_i32_54 : i32 to vector<16x16xi32>
      %116 = arith.select %57, %114, %115 : vector<16x16xi1>, vector<16x16xi32>
      %117 = arith.maxsi %113, %116 : vector<16x16xi32>
      %c0_i32_55 = arith.constant 0 : i32
      %118 = vector.broadcast %c0_i32_55 : i32 to vector<16x16xi32>
      %119 = arith.cmpi sgt, %117, %118 : vector<16x16xi32>
      %c0_56 = arith.constant 0 : index
      %c1_57 = arith.constant 1 : index
      %c0_58 = arith.constant 0 : index
      %c0_59 = arith.constant 0 : index
      %120 = vector.load %arg3[%c0_56, %c1_57, %c0_58, %c0_59] : memref<1x2x16x16xf32, #tpu.memory_space<vmem>>, vector<1x1x16x16xf32>
      %121 = vector.shape_cast %120 : vector<1x1x16x16xf32> to vector<16x16xf32>
      %c0_60 = arith.constant 0 : index
      %c0_61 = arith.constant 0 : index
      %c0_62 = arith.constant 0 : index
      %c0_63 = arith.constant 0 : index
      %122 = vector.load %arg3[%c0_60, %c0_61, %c0_62, %c0_63] : memref<1x2x16x16xf32, #tpu.memory_space<vmem>>, vector<1x1x16x16xf32>
      %123 = vector.shape_cast %122 : vector<1x1x16x16xf32> to vector<16x16xf32>
      %124 = arith.cmpf ogt, %121, %123 : vector<16x16xf32>
      %c255_i32_64 = arith.constant 255 : i32
      %125 = vector.broadcast %c255_i32_64 : i32 to vector<16x16xi32>
      %126 = arith.cmpi ne, %43, %125 : vector<16x16xi32>
      %127 = arith.andi %126, %119 : vector<16x16xi1>
      %128 = arith.andi %127, %124 : vector<16x16xi1>
      %129 = arith.extui %119 : vector<16x16xi1> to vector<16x16xi32>
      %130 = arith.sitofp %129 : vector<16x16xi32> to vector<16x16xf32>
      %131 = arith.extui %124 : vector<16x16xi1> to vector<16x16xi32>
      %132 = arith.sitofp %131 : vector<16x16xi32> to vector<16x16xf32>
      %133 = arith.subf %130, %132 : vector<16x16xf32>
      %134 = math.absf %133 : vector<16x16xf32>
      %cst = arith.constant 1.000000e+00 : f32
      %135 = vector.broadcast %cst : f32 to vector<16x16xf32>
      %136 = arith.cmpf olt, %134, %135 : vector<16x16xf32>
      %cst_65 = arith.constant 5.000000e-01 : f32
      %137 = vector.broadcast %cst_65 : f32 to vector<16x16xf32>
      %138 = arith.mulf %137, %133 : vector<16x16xf32>
      %139 = arith.mulf %138, %133 : vector<16x16xf32>
      %cst_66 = arith.constant 5.000000e-01 : f32
      %140 = vector.broadcast %cst_66 : f32 to vector<16x16xf32>
      %141 = arith.subf %134, %140 : vector<16x16xf32>
      %142 = arith.select %136, %139, %141 : vector<16x16xi1>, vector<16x16xf32>
      %cst_67 = arith.constant 0.000000e+00 : f32
      %143 = vector.broadcast %cst_67 : f32 to vector<16x16xf32>
      %144 = arith.select %128, %142, %143 : vector<16x16xi1>, vector<16x16xf32>
      %cst_68 = arith.constant dense<0.000000e+00> : vector<16xf32>
      %145 = vector.multi_reduction <add>, %144, %cst_68 [0] : vector<16x16xf32> to vector<16xf32>
      %146 = vector.shape_cast %145 : vector<16xf32> to vector<1x16xf32>
      %147 = arith.extui %128 : vector<16x16xi1> to vector<16x16xi32>
      %148 = arith.sitofp %147 : vector<16x16xi32> to vector<16x16xf32>
      %cst_69 = arith.constant dense<0.000000e+00> : vector<16xf32>
      %149 = vector.multi_reduction <add>, %148, %cst_69 [0] : vector<16x16xf32> to vector<16xf32>
      %150 = vector.shape_cast %149 : vector<16xf32> to vector<1x16xf32>
      %151 = vector.shape_cast %146 : vector<1x16xf32> to vector<1x1x16xf32>
      %c0_70 = arith.constant 0 : index
      %c0_71 = arith.constant 0 : index
      %c0_72 = arith.constant 0 : index
      %152 = vector.load %arg5[%c0_70, %c0_71, %c0_72] : memref<1x1x16xf32, #tpu.memory_space<vmem>>, vector<1x1x16xf32>
      tpu.vector_store %arg5[%c0_70, %c0_71, %c0_72], %151 {strides = array<i32>} : memref<1x1x16xf32, #tpu.memory_space<vmem>>, vector<1x1x16xf32>,
      %153 = vector.shape_cast %150 : vector<1x16xf32> to vector<1x1x16xf32>
      %c0_73 = arith.constant 0 : index
      %c0_74 = arith.constant 0 : index
      %c0_75 = arith.constant 0 : index
      %154 = vector.load %arg6[%c0_73, %c0_74, %c0_75] : memref<1x1x16xf32, #tpu.memory_space<vmem>>, vector<1x1x16xf32>
      tpu.vector_store %arg6[%c0_73, %c0_74, %c0_75], %153 {strides = array<i32>} : memref<1x1x16xf32, #tpu.memory_space<vmem>>, vector<1x1x16xf32>,
    } else {
    }
    return
  }
  func.func @transform_0(%arg0: i32, %arg1: i32) -> (i32, i32, i32, i32) {
    %c0_i32 = arith.constant 0 : i32
    %c0_i32_0 = arith.constant 0 : i32
    %c0_i32_1 = arith.constant 0 : i32
    return %arg0, %arg1, %c0_i32, %c0_i32_0 : i32, i32, i32, i32
  }
  func.func @transform_1(%arg0: i32, %arg1: i32) -> (i32, i32, i32, i32) {
    %c0_i32 = arith.constant 0 : i32
    %c0_i32_0 = arith.constant 0 : i32
    %c0_i32_1 = arith.constant 0 : i32
    %c0_i32_2 = arith.constant 0 : i32
    return %arg0, %c0_i32, %c0_i32_0, %c0_i32_1 : i32, i32, i32, i32
  }
  func.func @transform_2(%arg0: i32, %arg1: i32) -> (i32, i32, i32) {
    %c0_i32 = arith.constant 0 : i32
    %c0_i32_0 = arith.constant 0 : i32
    %c0_i32_1 = arith.constant 0 : i32
    return %arg0, %c0_i32, %c0_i32_0 : i32, i32, i32
  }
  func.func @transform_3(%arg0: i32, %arg1: i32) -> (i32, i32, i32) {
    %c0_i32 = arith.constant 0 : i32
    %c0_i32_0 = arith.constant 0 : i32
    %c0_i32_1 = arith.constant 0 : i32
    return %arg0, %c0_i32, %c0_i32_0 : i32, i32, i32
  }
  func.func @transform_4(%arg0: i32, %arg1: i32) -> (i32, i32, i32) {
    %c0_i32 = arith.constant 0 : i32
    %c0_i32_0 = arith.constant 0 : i32
    %c0_i32_1 = arith.constant 0 : i32
    return %arg0, %c0_i32, %c0_i32_0 : i32, i32, i32
  }
}

</mosaic_0001>

<llo_original>
// kernel: tpu_custom_call.1
$region0: #{tpu_custom_call.1}
  #allocation0 [shape = 'u32[]', space=smem, size = 0x4, offset = 0x4, fixed_abs, tag = 'smem constant byte address 0x4 - core index']
  #allocation1 [shape = 'u32[72,128]{1,0:T(1,128)}', space=vmem, size = 0x9000, scoped, tag = 'internal scratch']
  #allocation2 [shape = 'f32[16,16]{1,0:T(8,128)}', space=vmem, size = 0x2000, scoped, tag = 'scratch operand']
  #allocation3 [shape = 's32[16,16]{1,0:T(8,128)}', space=vmem, size = 0x2000, scoped, tag = 'scratch operand']
  %s0 = inlined_call_operand.hbm [shape: f32[2,4,16,16], index: 0, kind: input, shape index: {}]
  %s1 = inlined_call_operand.hbm [shape: f32[2,2,16,16], index: 1, kind: input, shape index: {}]
  %s2 = inlined_call_operand.hbm [shape: s32[2,16,16], index: 2, kind: input, shape index: {}]
  %s3 = inlined_call_operand.hbm [shape: f32[2,1,16], index: 3, kind: output, shape index: {0}]
  %s4 = inlined_call_operand.hbm [shape: f32[2,1,16], index: 4, kind: output, shape index: {1}]
  %5 = xla_tuple %s3, %s4
  %s6 = sld [smem:[#allocation0]]
  $region73: #{tpu_custom_call.1} parent=0
    _
  %s8 = ssub.s32 1, %s6
  %s9 = scalar_select 0, %s8, %s6
  $region1: #{tpu_custom_call.1} parent=0
    #allocation4 [shape = 'u8[65536]{0}', space=vmem, size = 0x10000, scoped, tag = 'input window, operand 0']
    #allocation5 [shape = 's32[2]{0}', space=sflag, size = 0x8, scoped, tag = 'scoped memory for tpu_custom_call.1']
    #allocation6 [shape = 's32[2]{0}', space=sflag, size = 0x8, scoped, tag = 'scoped memory for tpu_custom_call.1']
    #allocation7 [shape = 'u8[32768]{0}', space=vmem, size = 0x8000, scoped, tag = 'input window, operand 1']
    #allocation8 [shape = 's32[2]{0}', space=sflag, size = 0x8, scoped, tag = 'scoped memory for tpu_custom_call.1']
    #allocation9 [shape = 'u8[16384]{0}', space=vmem, size = 0x4000, scoped, tag = 'input window, operand 2']
    #allocation10 [shape = 'u8[1024]{0}', space=vmem, size = 0x400, scoped, tag = 'output window, operand 0']
    #allocation11 [shape = 'u8[1024]{0}', space=vmem, size = 0x400, scoped, tag = 'output window, operand 1']
    #allocation12 [shape = 's32[2]{0}', space=sflag, size = 0x8, scoped, tag = 'scoped memory for tpu_custom_call.1']
    %10 = vsyncpa [#allocation5], 0
    %s11 = scalar_lea.sflag [#allocation5], 1
    %12 = vsyncpa %s11, 0
    %13 = vsyncpa [#allocation8], 0
    %s14 = scalar_lea.sflag [#allocation8], 1
    %15 = vsyncpa %s14, 0
    %16 = vsyncpa [#allocation6], 0
    %s17 = scalar_lea.sflag [#allocation6], 1
    %18 = vsyncpa %s17, 0
    %19 = vsyncpa [#allocation12], 0
    %s20 = scalar_lea.sflag [#allocation12], 1
    %21 = vsyncpa %s20, 0
    loop: start=0, step=1, limit=4
    $region2: #{tpu_custom_call.1} parent=1 // loop_pre_header
      _
    $region3: #{tpu_custom_call.1} parent=1 // loop_header
      %s23 = sphi 0, %s27
      %p24 = scmp.ge.s32.totalorder %s23, 4
      %s30 = sphi 0, %s42
      %s31 = sphi 0, %s38
      %s32 = sphi 0, %s30
      %s33 = sphi 0, %s31
      %s34 = sphi 0, %s32
      %s35 = sphi 0, %s33
      %s47 = sphi 0, %s49
      %s50 = sphi 0, %s47
      %s51 = sphi 0, %s50
      %s67 = sphi 0, %s51
      %s73 = sphi 0, %s75
      %s76 = sphi 0, %s73
      %s77 = sphi 0, %s76
      %s93 = sphi 0, %s77
      %s99 = sphi 0, %s101
      %s102 = sphi 0, %s99
      %s103 = sphi 0, %s102
      %s119 = sphi 0, %s103
      %s125 = sphi 0, %s127
      %s128 = sphi 0, %s125
      %s129 = sphi 0, %s128
      %s145 = sphi 0, %s129
      %s151 = sphi 0, %s153
      %s154 = sphi 0, %s151
      %s155 = sphi 0, %s154
      %s171 = sphi 0, %s155
    $region4: #{tpu_custom_call.1} parent=1 // loop_header_branch
      %26 = sbr.rel (%p24) target = $region8
    $region5: #{tpu_custom_call.1} parent=1 // loop_body
      %s28 = ssub.s32 %s23, 1
      %s29 = ssub.s32 %s23, 2
      %s36 = sadd.s32 1, %s31
      %p37 = scmp.ge.s32.totalorder %s36, 1
      %s38 = scalar_select %p37, 0, %s36
      %s39 = sadd.s32 1, %s30
      %s40 = scalar_select %p37, %s39, %s30
      %p41 = scmp.ge.s32.totalorder %s40, 2
      %s42 = scalar_select %p41, 0, %s40
      %s43 = ssub.s32 %s30, %s42
      %s44 = ssub.s32 %s31, %s38
      %s45 = sor.u32 %s43, %s44
      %p46 = scmp.eq.s32.totalorder %s45, 0
      %s48 = sadd.s32 %s47, 1
      %s49 = scalar_select %p46, %s47, %s48
      %p52 = pneg %p46
      %p53 = scmp.eq.s32.totalorder %s23, 1
      %p54 = por %p52, %p53
      %p55 = scmp.ne.s32.totalorder %s47, %s50
      %p56 = scmp.eq.s32.totalorder %s23, 0
      %p57 = por %p55, %p56
      %p58 = scmp.ne.s32.totalorder %s47, %s50
      %p59 = scmp.eq.s32.totalorder %s28, 1
      %p60 = por %p58, %p59
      %p61 = scmp.ne.s32.totalorder %s50, %s51
      %p62 = scmp.eq.s32.totalorder %s28, 0
      %p63 = por %p61, %p62
      %p64 = scmp.ne.s32.totalorder %s50, %s51
      %p65 = scmp.eq.s32.totalorder %s29, 1
      %p66 = por %p64, %p65
      %p68 = scmp.ne.s32.totalorder %s51, %s67
      %p69 = scmp.eq.s32.totalorder %s29, 0
      %p70 = por %p68, %p69
      %s71 = ssub.s32 %s30, %s42
      %p72 = scmp.eq.s32.totalorder %s71, 0
      %s74 = sadd.s32 %s73, 1
      %s75 = scalar_select %p72, %s73, %s74
      %p78 = pneg %p72
      %p79 = scmp.eq.s32.totalorder %s23, 1
      %p80 = por %p78, %p79
      %p81 = scmp.ne.s32.totalorder %s73, %s76
      %p82 = scmp.eq.s32.totalorder %s23, 0
      %p83 = por %p81, %p82
      %p84 = scmp.ne.s32.totalorder %s73, %s76
      %p85 = scmp.eq.s32.totalorder %s28, 1
      %p86 = por %p84, %p85
      %p87 = scmp.ne.s32.totalorder %s76, %s77
      %p88 = scmp.eq.s32.totalorder %s28, 0
      %p89 = por %p87, %p88
      %p90 = scmp.ne.s32.totalorder %s76, %s77
      %p91 = scmp.eq.s32.totalorder %s29, 1
      %p92 = por %p90, %p91
      %p94 = scmp.ne.s32.totalorder %s77, %s93
      %p95 = scmp.eq.s32.totalorder %s29, 0
      %p96 = por %p94, %p95
      %s97 = ssub.s32 %s30, %s42
      %p98 = scmp.eq.s32.totalorder %s97, 0
      %s100 = sadd.s32 %s99, 1
      %s101 = scalar_select %p98, %s99, %s100
      %p104 = pneg %p98
      %p105 = scmp.eq.s32.totalorder %s23, 1
      %p106 = por %p104, %p105
      %p107 = scmp.ne.s32.totalorder %s99, %s102
      %p108 = scmp.eq.s32.totalorder %s23, 0
      %p109 = por %p107, %p108
      %p110 = scmp.ne.s32.totalorder %s99, %s102
      %p111 = scmp.eq.s32.totalorder %s28, 1
      %p112 = por %p110, %p111
      %p113 = scmp.ne.s32.totalorder %s102, %s103
      %p114 = scmp.eq.s32.totalorder %s28, 0
      %p115 = por %p113, %p114
      %p116 = scmp.ne.s32.totalorder %s102, %s103
      %p117 = scmp.eq.s32.totalorder %s29, 1
      %p118 = por %p116, %p117
      %p120 = scmp.ne.s32.totalorder %s103, %s119
      %p121 = scmp.eq.s32.totalorder %s29, 0
      %p122 = por %p120, %p121
      %s123 = ssub.s32 %s30, %s42
      %p124 = scmp.eq.s32.totalorder %s123, 0
      %s126 = sadd.s32 %s125, 1
      %s127 = scalar_select %p124, %s125, %s126
      %p130 = pneg %p124
      %p131 = scmp.eq.s32.totalorder %s23, 1
      %p132 = por %p130, %p131
      %p133 = scmp.ne.s32.totalorder %s125, %s128
      %p134 = scmp.eq.s32.totalorder %s23, 0
      %p135 = por %p133, %p134
      %p136 = scmp.ne.s32.totalorder %s125, %s128
      %p137 = scmp.eq.s32.totalorder %s28, 1
      %p138 = por %p136, %p137
      %p139 = scmp.ne.s32.totalorder %s128, %s129
      %p140 = scmp.eq.s32.totalorder %s28, 0
      %p141 = por %p139, %p140
      %p142 = scmp.ne.s32.totalorder %s128, %s129
      %p143 = scmp.eq.s32.totalorder %s29, 1
      %p144 = por %p142, %p143
      %p146 = scmp.ne.s32.totalorder %s129, %s145
      %p147 = scmp.eq.s32.totalorder %s29, 0
      %p148 = por %p146, %p147
      %s149 = ssub.s32 %s30, %s42
      %p150 = scmp.eq.s32.totalorder %s149, 0
      %s152 = sadd.s32 %s151, 1
      %s153 = scalar_select %p150, %s151, %s152
      %p156 = pneg %p150
      %p157 = scmp.eq.s32.totalorder %s23, 1
      %p158 = por %p156, %p157
      %p159 = scmp.ne.s32.totalorder %s151, %s154
      %p160 = scmp.eq.s32.totalorder %s23, 0
      %p161 = por %p159, %p160
      %p162 = scmp.ne.s32.totalorder %s151, %s154
      %p163 = scmp.eq.s32.totalorder %s28, 1
      %p164 = por %p162, %p163
      %p165 = scmp.ne.s32.totalorder %s154, %s155
      %p166 = scmp.eq.s32.totalorder %s28, 0
      %p167 = por %p165, %p166
      %p168 = scmp.ne.s32.totalorder %s154, %s155
      %p169 = scmp.eq.s32.totalorder %s29, 1
      %p170 = por %p168, %p169
      %p172 = scmp.ne.s32.totalorder %s155, %s171
      %p173 = scmp.eq.s32.totalorder %s29, 0
      %p174 = por %p172, %p173
      %p175 = scmp.le.s32.totalorder 1, %s23
      %p176 = scmp.lt.s32.totalorder %s23, 3
      %p177 = pnand %p175, %p176
      %p178 = pneg %p177
      // Predicated region
      $region9: #{tpu_custom_call.1} parent=5 // pred_check
        _
      $region10: #{tpu_custom_call.1} parent=5 // pred_check_branch
        %180 = sbr.rel (%p177) target = $region12
      $region11: #{tpu_custom_call.1} parent=5 // pred_region
        %s181 = ssub.s32 %s23, 1
      $region12: #{tpu_custom_call.1} parent=5 // pred_fallthru
        _
      %p182 = scmp.lt.s32.totalorder %s23, 2
      // Predicated region
      $region13: #{tpu_custom_call.1} parent=5 // pred_check
        %p183 = pneg %p182
      $region14: #{tpu_custom_call.1} parent=5 // pred_check_branch
        %185 = sbr.rel (%p183) target = $region16
      $region15: #{tpu_custom_call.1} parent=5 // pred_region
        // Predicated region
        $region17: #{tpu_custom_call.1} parent=15 // pred_check
          %p186 = pneg %p57
        $region18: #{tpu_custom_call.1} parent=15 // pred_check_branch
          %188 = sbr.rel (%p186) target = $region20
        $region19: #{tpu_custom_call.1} parent=15 // pred_region
          %s189 = sand.u32 %s47, 1
          %s190 = scalar_lea.sflag [#allocation5], %s189
          %s191 = sand.u32 %s47, 1
          %s192 = smul.addr %s191, 64
          %s193 = scalar_lea.vmem [#allocation4], %s192
          %s194 = smul.u32 4, %s31
          %196 = vsyncadd %s190, 0
          %s197 = smul.addr %s194, 2
          %s198 = smul.addr %s30, 8
          %s199 = sadd.s32 %s197, %s198
          %s200 = smul.addr %s199, 8
          %s201 = scalar_lea.hbm %s0, %s200
          %s202 = sshll.u32 %s201, 4
          %s203 = int_to_ptr.hbm [resolvable:$true] %s202
          %s204 = sshll.u32 %s193, 4
          %s205 = int_to_ptr.vmem [resolvable:$true] %s204
          %210 = dma.hbm_to_vmem [thread:$0]  %s203, 1024, %s205, %s190, 128, 128, 8
        $region20: #{tpu_custom_call.1} parent=15 // pred_fallthru
          _
        // Predicated region
        $region21: #{tpu_custom_call.1} parent=15 // pred_check
          %p211 = pneg %p83
        $region22: #{tpu_custom_call.1} parent=15 // pred_check_branch
          %213 = sbr.rel (%p211) target = $region24
        $region23: #{tpu_custom_call.1} parent=15 // pred_region
          %s214 = sand.u32 %s23, 1
          %s215 = scalar_lea.sflag [#allocation8], %s214
          %s216 = sand.u32 %s73, 1
          %s217 = smul.addr %s216, 32
          %s218 = scalar_lea.vmem [#allocation7], %s217
          %220 = vsyncadd %s215, 0
          %s221 = smul.addr %s30, 4
          %s222 = smul.addr %s221, 8
          %s223 = scalar_lea.hbm %s1, %s222
          %s224 = sshll.u32 %s223, 4
          %s225 = int_to_ptr.hbm [resolvable:$true] %s224
          %s226 = sshll.u32 %s218, 4
          %s227 = int_to_ptr.vmem [resolvable:$true] %s226
          %232 = dma.hbm_to_vmem [thread:$0]  %s225, 512, %s227, %s215, 128, 128, 8
        $region24: #{tpu_custom_call.1} parent=15 // pred_fallthru
          _
        // Predicated region
        $region25: #{tpu_custom_call.1} parent=15 // pred_check
          %p233 = pneg %p109
        $region26: #{tpu_custom_call.1} parent=15 // pred_check_branch
          %235 = sbr.rel (%p233) target = $region28
        $region27: #{tpu_custom_call.1} parent=15 // pred_region
          %s236 = sand.u32 %s23, 1
          %s237 = scalar_lea.sflag [#allocation8], %s236
          %s238 = sand.u32 %s99, 1
          %s239 = smul.addr %s238, 16
          %s240 = scalar_lea.vmem [#allocation9], %s239
          %242 = vsyncadd %s237, 0
          %s243 = smul.addr %s30, 2
          %s244 = smul.addr %s243, 8
          %s245 = scalar_lea.hbm %s2, %s244
          %s246 = sshll.u32 %s245, 4
          %s247 = int_to_ptr.hbm [resolvable:$true] %s246
          %s248 = sshll.u32 %s240, 4
          %s249 = int_to_ptr.vmem [resolvable:$true] %s248
          %254 = dma.hbm_to_vmem [thread:$0]  %s247, 256, %s249, %s237, 128, 128, 8
        $region28: #{tpu_custom_call.1} parent=15 // pred_fallthru
          _
      $region16: #{tpu_custom_call.1} parent=5 // pred_fallthru
        _
      %p255 = scmp.le.s32.totalorder 1, %s23
      %p256 = scmp.lt.s32.totalorder %s23, 3
      %p257 = pnand %p255, %p256
      %p258 = pneg %p257
      // Predicated region
      $region29: #{tpu_custom_call.1} parent=5 // pred_check
        _
      $region30: #{tpu_custom_call.1} parent=5 // pred_check_branch
        %260 = sbr.rel (%p257) target = $region32
      $region31: #{tpu_custom_call.1} parent=5 // pred_region
        %s261 = ssub.s32 %s23, 1
        %s262 = sand.u32 %s50, 1
        %s263 = scalar_lea.sflag [#allocation5], %s262
        %s264 = sand.u32 %s50, 1
        %s265 = smul.addr %s264, 64
        %s266 = scalar_lea.vmem [#allocation4], %s265
        // Predicated region
        $region33: #{tpu_custom_call.1} parent=31 // pred_check
          %p267 = pneg %p63
        $region34: #{tpu_custom_call.1} parent=31 // pred_check_branch
          %269 = sbr.rel (%p267) target = $region36
        $region35: #{tpu_custom_call.1} parent=31 // pred_region
          %271 = dma.done %s263, 1024
        $region36: #{tpu_custom_call.1} parent=31 // pred_fallthru
          _
        %s272 = sand.u32 %s28, 1
        %s273 = scalar_lea.sflag [#allocation8], %s272
        %s274 = sand.u32 %s76, 1
        %s275 = smul.addr %s274, 32
        %s276 = scalar_lea.vmem [#allocation7], %s275
        // Predicated region
        $region37: #{tpu_custom_call.1} parent=31 // pred_check
          %p277 = pneg %p89
        $region38: #{tpu_custom_call.1} parent=31 // pred_check_branch
          %279 = sbr.rel (%p277) target = $region40
        $region39: #{tpu_custom_call.1} parent=31 // pred_region
          %281 = dma.done %s273, 512
        $region40: #{tpu_custom_call.1} parent=31 // pred_fallthru
          _
        %s282 = sand.u32 %s28, 1
        %s283 = scalar_lea.sflag [#allocation8], %s282
        %s284 = sand.u32 %s102, 1
        %s285 = smul.addr %s284, 16
        %s286 = scalar_lea.vmem [#allocation9], %s285
        // Predicated region
        $region41: #{tpu_custom_call.1} parent=31 // pred_check
          %p287 = pneg %p115
        $region42: #{tpu_custom_call.1} parent=31 // pred_check_branch
          %289 = sbr.rel (%p287) target = $region44
        $region43: #{tpu_custom_call.1} parent=31 // pred_region
          %291 = dma.done %s283, 256
        $region44: #{tpu_custom_call.1} parent=31 // pred_fallthru
          _
        %s292 = sand.u32 %s50, 1
        %s293 = scalar_lea.sflag [#allocation5], %s292
        %s294 = sand.u32 %s50, 1
        %s295 = smul.addr %s294, 64
        %s296 = scalar_lea.vmem [#allocation4], %s295
        %p297 = pneg %p63
        %p298 = pneg %p60
        %s299 = sand.u32 %s28, 1
        %s300 = scalar_lea.sflag [#allocation8], %s299
        %s301 = sand.u32 %s76, 1
        %s302 = smul.addr %s301, 32
        %s303 = scalar_lea.vmem [#allocation7], %s302
        %p304 = pneg %p89
        %p305 = pneg %p86
        %s306 = sand.u32 %s28, 1
        %s307 = scalar_lea.sflag [#allocation8], %s306
        %s308 = sand.u32 %s102, 1
        %s309 = smul.addr %s308, 16
        %s310 = scalar_lea.vmem [#allocation9], %s309
        %p311 = pneg %p115
        %p312 = pneg %p112
        %p313 = pneg %p141
        %p314 = pneg %p138
        %s315 = sand.u32 %s128, 1
        %s316 = scalar_lea.sflag [#allocation6], %s315
        %s317 = sand.u32 %s128, 1
        %s318 = scalar_lea.vmem [#allocation10], %s317
        %p319 = pneg %p167
        %p320 = pneg %p164
        %s321 = sand.u32 %s154, 1
        %s322 = scalar_lea.sflag [#allocation12], %s321
        %s323 = sand.u32 %s154, 1
        %s324 = scalar_lea.vmem [#allocation11], %s323
        %s325 = smul.u32 4, %s33
        %p326 = scmp.eq.s32.totalorder %s33, 0
        // Predicated region
        $region45: #{tpu_custom_call.1} parent=31 // pred_check
          %p327 = pneg %p326
        $region46: #{tpu_custom_call.1} parent=31 // pred_check_branch
          %329 = sbr.rel (%p327) target = $region48
        $region47: #{tpu_custom_call.1} parent=31 // pred_region
          %vm330 = vcmask 130048
          %331 = vst.msk [vmem:[#allocation2] sm:$0xff] %vm330, -inf
          %332 = vst.msk [vmem:[#allocation2 + $0x8] sm:$0xff] %vm330, -inf
          %333 = vst.msk [vmem:[#allocation3] sm:$0xff] %vm330, 0
          %334 = vst.msk [vmem:[#allocation3 + $0x8] sm:$0xff] %vm330, 0
        $region48: #{tpu_custom_call.1} parent=31 // pred_fallthru
          _
        %v335 = vld [vmem:[#allocation2] sm:$0xff]
        %v336 = vld [vmem:[#allocation2 + $0x8] sm:$0xff]
        %v337 = vld [vmem:[#allocation3] sm:$0xff]
        %v338 = vld [vmem:[#allocation3 + $0x8] sm:$0xff]
        %v339 = vld [vmem:[%s266] sm:$0xff]
        %v340 = vld [vmem:[%s266 + $0x8] sm:$0xff]
        %vm341 = vcmp.gt.f32.partialorder %v339, %v335
        %vm342 = vcmp.gt.f32.partialorder %v340, %v336
        %s343 = smul.u32 %s33, 4
        %v344 = vstv %s343
        %v345 = vsel %vm341, %v344, %v337
        %v346 = vsel %vm342, %v344, %v338
        %v347 = vsel %vm341, %v339, %v335
        %v348 = vsel %vm342, %v340, %v336
        %s349 = scalar_lea.vmem %s266, 16 [#allocation4]
        %v350 = vld [vmem:[%s349] sm:$0xff]
        %v351 = vld [vmem:[%s349 + $0x8] sm:$0xff]
        %vm352 = vcmp.gt.f32.partialorder %v350, %v347
        %vm353 = vcmp.gt.f32.partialorder %v351, %v348
        %s354 = sadd.s32 %s343, 1
        %v355 = vstv %s354
        %v356 = vsel %vm352, %v355, %v345
        %v357 = vsel %vm353, %v355, %v346
        %v358 = vsel %vm352, %v350, %v347
        %v359 = vsel %vm353, %v351, %v348
        %s360 = scalar_lea.vmem %s266, 32 [#allocation4]
        %v361 = vld [vmem:[%s360] sm:$0xff]
        %v362 = vld [vmem:[%s360 + $0x8] sm:$0xff]
        %vm363 = vcmp.gt.f32.partialorder %v361, %v358
        %vm364 = vcmp.gt.f32.partialorder %v362, %v359
        %s365 = sadd.s32 %s343, 2
        %v366 = vstv %s365
        %v367 = vsel %vm363, %v366, %v356
        %v368 = vsel %vm364, %v366, %v357
        %v369 = vsel %vm363, %v361, %v358
        %v370 = vsel %vm364, %v362, %v359
        %s371 = scalar_lea.vmem %s266, 48 [#allocation4]
        %v372 = vld [vmem:[%s371] sm:$0xff]
        %v373 = vld [vmem:[%s371 + $0x8] sm:$0xff]
        %vm374 = vcmp.gt.f32.partialorder %v372, %v369
        %vm375 = vcmp.gt.f32.partialorder %v373, %v370
        %s376 = sadd.s32 %s343, 3
        %v377 = vstv %s376
        %v378 = vsel %vm374, %v377, %v367
        %v379 = vsel %vm375, %v377, %v368
        %v380 = vsel %vm374, %v372, %v369
        %v381 = vsel %vm375, %v373, %v370
        %vm382 = vcmask 130048
        %383 = vst.msk [vmem:[#allocation2] sm:$0xff] %vm382, %v380
        %384 = vst.msk [vmem:[#allocation2 + $0x8] sm:$0xff] %vm382, %v381
        %385 = vst.msk [vmem:[#allocation3] sm:$0xff] %vm382, %v378
        %386 = vst.msk [vmem:[#allocation3 + $0x8] sm:$0xff] %vm382, %v379
        // Predicated region
        $region49: #{tpu_custom_call.1} parent=31 // pred_check
          %p387 = pneg %p326
        $region50: #{tpu_custom_call.1} parent=31 // pred_check_branch
          %389 = sbr.rel (%p387) target = $region52
        $region51: #{tpu_custom_call.1} parent=31 // pred_region
          %v390 = vld [vmem:[%s286] sm:$0xff]
          %v391 = vld [vmem:[%s286 + $0x8] sm:$0xff]
          %vm392 = vcmp.eq.s32.totalorder %v390, 255
          %vm393 = vcmp.eq.s32.totalorder %v391, 255
          %v394 = vsel %vm392, 255, %v378
          %v395 = vsel %vm393, 255, %v379
          %v396 = vlaneseq
          %v397 = vshrl.u32 %v396, 7
          %v398 = vadd.s32 %v397, 8
          %v399 = vlaneseq
          %v400 = vand.u32 %v399, 127
          %vm401 = vcmp.ge.s32.totalorder %v397, 1
          %vm402 = vcmp.ge.s32.totalorder %v398, 1
          %vm403 = vcmp.le.s32.totalorder %v397, 14
          %vm404 = vcmp.le.s32.totalorder %v398, 14
          %vm405 = vcmp.ge.s32.totalorder %v400, 1
          %vm406 = vcmp.le.s32.totalorder %v400, 14
          %v407 = vrot.slane %v394, 7
          %v408 = vrot.slane %v395, 7
          %vm409 = vcmp.lt.s32.totalorder %v397, 1
          %v410 = vsel %vm409, %v407, %v408
          %v411 = vsel %vm409, %v408, %v407
          %vm412 = vcmp.ne.s32.totalorder %v394, %v411
          %vm413 = vcmp.ne.s32.totalorder %v395, %v410
          %vm414 = vcmp.ne.s32.totalorder %v394, 255
          %vm415 = vcmp.ne.s32.totalorder %v395, 255
          %vm416 = vmand %vm412, %vm414
          %vm417 = vmand %vm413, %vm415
          %vm418 = vcmp.ne.s32.totalorder %v411, 255
          %vm419 = vcmp.ne.s32.totalorder %v410, 255
          %vm420 = vmand %vm416, %vm418
          %vm421 = vmand %vm417, %vm419
          %vm422 = vmand %vm420, %vm401
          %vm423 = vmand %vm421, %vm402
          %vm424 = vcmask 1047680
          %425 = vrot.lane.b32.xlu0 %v394, 16
          %v426 = vpop.permute.xlu0 %425
          %v427 = vsel %vm424, %v426, %v394
          %428 = vrot.lane.b32.xlu0 %v395, 16
          %v429 = vpop.permute.xlu0 %428
          %v430 = vsel %vm424, %v429, %v395
          %431 = vrot.lane.b32.xlu0 %v427, 16
          %v432 = vpop.permute.xlu0 %431
          %433 = vrot.lane.b32.xlu0 %v430, 16
          %v434 = vpop.permute.xlu0 %433
          %v435 = vsel %vm424, %v432, %v394
          %v436 = vsel %vm424, %v434, %v395
          %437 = vrot.lane.b32.xlu0 %v435, 127
          %v438 = vpop.permute.xlu0 %437
          %439 = vrot.lane.b32.xlu0 %v436, 127
          %v440 = vpop.permute.xlu0 %439
          %vm441 = vcmp.ne.s32.totalorder %v394, %v438
          %vm442 = vcmp.ne.s32.totalorder %v395, %v440
          %vm443 = vmand %vm441, %vm414
          %vm444 = vmand %vm442, %vm415
          %vm445 = vcmp.ne.s32.totalorder %v435, 255
          %vm446 = vcmp.ne.s32.totalorder %v436, 255
          %v447 = vsel %vm445, 1, 0
          %v448 = vsel %vm446, 1, 0
          %449 = vrot.lane.b32.xlu0 %v447, 127
          %v450 = vpop.permute.xlu0 %449
          %451 = vrot.lane.b32.xlu0 %v448, 127
          %v452 = vpop.permute.xlu0 %451
          %vm453 = vcmp.ne.s32.totalorder %v450, 0
          %vm454 = vcmp.ne.s32.totalorder %v452, 0
          %vm455 = vmand %vm443, %vm453
          %vm456 = vmand %vm444, %vm454
          %vm457 = vmand %vm455, %vm406
          %vm458 = vmand %vm456, %vm406
          %vm459 = vmor %vm422, %vm457
          %vm460 = vmor %vm423, %vm458
          %v461 = vrot.slane %v394, 1
          %v462 = vrot.slane %v395, 1
          %vm463 = vcmp.lt.s32.totalorder %v397, 7
          %v464 = vsel %vm463, %v461, %v462
          %v465 = vsel %vm463, %v462, %v461
          %466 = vrot.lane.b32.xlu0 %v464, 16
          %v467 = vpop.permute.xlu0 %466
          %v468 = vsel %vm424, %v467, %v464
          %469 = vrot.lane.b32.xlu0 %v465, 16
          %v470 = vpop.permute.xlu0 %469
          %v471 = vsel %vm424, %v470, %v465
          %472 = vrot.lane.b32.xlu0 %v468, 16
          %v473 = vpop.permute.xlu0 %472
          %474 = vrot.lane.b32.xlu0 %v471, 16
          %v475 = vpop.permute.xlu0 %474
          %v476 = vsel %vm424, %v473, %v464
          %v477 = vsel %vm424, %v475, %v465
          %478 = vrot.lane.b32.xlu0 %v476, 127
          %v479 = vpop.permute.xlu0 %478
          %480 = vrot.lane.b32.xlu0 %v477, 127
          %v481 = vpop.permute.xlu0 %480
          %vm482 = vcmp.ne.s32.totalorder %v394, %v479
          %vm483 = vcmp.ne.s32.totalorder %v395, %v481
          %vm484 = vmand %vm482, %vm414
          %vm485 = vmand %vm483, %vm415
          %vm486 = vcmp.ne.s32.totalorder %v476, 255
          %vm487 = vcmp.ne.s32.totalorder %v477, 255
          %v488 = vsel %vm486, 1, 0
          %v489 = vsel %vm487, 1, 0
          %490 = vrot.lane.b32.xlu0 %v488, 127
          %v491 = vpop.permute.xlu0 %490
          %492 = vrot.lane.b32.xlu0 %v489, 127
          %v493 = vpop.permute.xlu0 %492
          %vm494 = vcmp.ne.s32.totalorder %v491, 0
          %vm495 = vcmp.ne.s32.totalorder %v493, 0
          %vm496 = vmand %vm484, %vm494
          %vm497 = vmand %vm485, %vm495
          %vm498 = vmand %vm496, %vm403
          %vm499 = vmand %vm497, %vm404
          %vm500 = vmand %vm498, %vm406
          %vm501 = vmand %vm499, %vm406
          %vm502 = vmor %vm459, %vm500
          %vm503 = vmor %vm460, %vm501
          %504 = vrot.lane.b32.xlu0 %v476, 113
          %v505 = vpop.permute.xlu0 %504
          %506 = vrot.lane.b32.xlu0 %v477, 113
          %v507 = vpop.permute.xlu0 %506
          %vm508 = vcmp.ne.s32.totalorder %v394, %v505
          %vm509 = vcmp.ne.s32.totalorder %v395, %v507
          %vm510 = vmand %vm508, %vm414
          %vm511 = vmand %vm509, %vm415
          %512 = vrot.lane.b32.xlu0 %v488, 113
          %v513 = vpop.permute.xlu0 %512
          %514 = vrot.lane.b32.xlu0 %v489, 113
          %v515 = vpop.permute.xlu0 %514
          %vm516 = vcmp.ne.s32.totalorder %v513, 0
          %vm517 = vcmp.ne.s32.totalorder %v515, 0
          %vm518 = vmand %vm510, %vm516
          %vm519 = vmand %vm511, %vm517
          %vm520 = vmand %vm518, %vm403
          %vm521 = vmand %vm519, %vm404
          %vm522 = vmand %vm520, %vm405
          %vm523 = vmand %vm521, %vm405
          %vm524 = vmor %vm502, %vm522
          %vm525 = vmor %vm503, %vm523
          %v526 = vsel %vm524, 1, 0
          %v527 = vsel %vm525, 1, 0
          %v528 = vrot.slane %v526, 7
          %v529 = vrot.slane %v527, 7
          %v530 = vsel %vm409, %v528, %v529
          %v531 = vsel %vm409, %v529, %v528
          %v532 = vsel %vm401, %v531, 0
          %v533 = vsel %vm402, %v530, 0
          %vm534 = vcmp.gt.s32.totalorder %v526, %v532
          %v535 = vsel %vm534, %v526, %v532
          %vm536 = vcmp.gt.s32.totalorder %v527, %v533
          %v537 = vsel %vm536, %v527, %v533
          %v538 = vrot.slane %v526, 1
          %v539 = vrot.slane %v527, 1
          %v540 = vsel %vm463, %v538, %v539
          %v541 = vsel %vm463, %v539, %v538
          %v542 = vsel %vm403, %v540, 0
          %v543 = vsel %vm404, %v541, 0
          %vm544 = vcmp.gt.s32.totalorder %v535, %v542
          %v545 = vsel %vm544, %v535, %v542
          %vm546 = vcmp.gt.s32.totalorder %v537, %v543
          %v547 = vsel %vm546, %v537, %v543
          %548 = vrot.lane.b32.xlu0 %v545, 16
          %v549 = vpop.permute.xlu0 %548
          %v550 = vsel %vm424, %v549, %v545
          %551 = vrot.lane.b32.xlu0 %v547, 16
          %v552 = vpop.permute.xlu0 %551
          %v553 = vsel %vm424, %v552, %v547
          %554 = vrot.lane.b32.xlu0 %v550, 16
          %v555 = vpop.permute.xlu0 %554
          %556 = vrot.lane.b32.xlu0 %v553, 16
          %v557 = vpop.permute.xlu0 %556
          %v558 = vsel %vm424, %v555, %v545
          %v559 = vsel %vm424, %v557, %v547
          %560 = vrot.lane.b32.xlu0 %v558, 113
          %v561 = vpop.permute.xlu0 %560
          %562 = vrot.lane.b32.xlu0 %v559, 113
          %v563 = vpop.permute.xlu0 %562
          %v564 = vsel %vm405, %v561, 0
          %v565 = vsel %vm405, %v563, 0
          %vm566 = vcmp.gt.s32.totalorder %v545, %v564
          %v567 = vsel %vm566, %v545, %v564
          %vm568 = vcmp.gt.s32.totalorder %v547, %v565
          %v569 = vsel %vm568, %v547, %v565
          %570 = vrot.lane.b32.xlu0 %v558, 127
          %v571 = vpop.permute.xlu0 %570
          %572 = vrot.lane.b32.xlu0 %v559, 127
          %v573 = vpop.permute.xlu0 %572
          %v574 = vsel %vm406, %v571, 0
          %v575 = vsel %vm406, %v573, 0
          %vm576 = vcmp.gt.s32.totalorder %v567, %v574
          %v577 = vsel %vm576, %v567, %v574
          %vm578 = vcmp.gt.s32.totalorder %v569, %v575
          %v579 = vsel %vm578, %v569, %v575
          %vm580 = vcmp.gt.s32.totalorder %v577, 0
          %vm581 = vcmp.gt.s32.totalorder %v579, 0
          %s582 = scalar_lea.vmem %s276, 16 [#allocation7]
          %v583 = vld [vmem:[%s582] sm:$0xff]
          %v584 = vld [vmem:[%s582 + $0x8] sm:$0xff]
          %v585 = vld [vmem:[%s276] sm:$0xff]
          %v586 = vld [vmem:[%s276 + $0x8] sm:$0xff]
          %vm587 = vcmp.gt.f32.partialorder %v583, %v585
          %vm588 = vcmp.gt.f32.partialorder %v584, %v586
          %vm589 = vcmp.ne.s32.totalorder %v390, 255
          %vm590 = vcmp.ne.s32.totalorder %v391, 255
          %vm591 = vmand %vm589, %vm580
          %vm592 = vmand %vm590, %vm581
          %vm593 = vmand %vm591, %vm587
          %vm594 = vmand %vm592, %vm588
          %v595 = vsel %vm580, 1, 0
          %v596 = vsel %vm581, 1, 0
          %v597 = vcvt.s32.f32 %v595
          %v598 = vcvt.s32.f32 %v596
          %v599 = vsel %vm587, 1, 0
          %v600 = vsel %vm588, 1, 0
          %v601 = vcvt.s32.f32 %v599
          %v602 = vcvt.s32.f32 %v600
          %v603 = vsub.f32 %v597, %v601
          %v604 = vsub.f32 %v598, %v602
          %v605 = vand.u32 2147483647, %v603
          %v606 = vand.u32 2147483647, %v604
          %vm607 = vcmp.lt.f32.partialorder %v605, 1.0
          %vm608 = vcmp.lt.f32.partialorder %v606, 1.0
          %v609 = vmul.f32 %v603, 0.5
          %v610 = vmul.f32 %v604, 0.5
          %v611 = vmul.f32 %v609, %v603
          %v612 = vmul.f32 %v610, %v604
          %v613 = vsub.f32 %v605, 0.5
          %v614 = vsub.f32 %v606, 0.5
          %v615 = vsel %vm607, %v611, %v613
          %v616 = vsel %vm608, %v612, %v614
          %v617 = vsel %vm593, %v615, 0.0
          %v618 = vsel %vm594, %v616, 0.0
          %v619 = vsel %vm382, %v617, 0.0
          %v620 = vsel %vm382, %v618, 0.0
          %v621 = vadd.f32 %v619, %v620
          %v622 = vrot.slane %v621, 4
          %v623 = vadd.f32 %v621, %v622
          %v624 = vrot.slane %v623, 2
          %v625 = vadd.f32 %v623, %v624
          %v626 = vrot.slane %v625, 1
          %v627 = vadd.f32 %v625, %v626
          %v628 = vsel %vm593, 1, 0
          %v629 = vsel %vm594, 1, 0
          %v630 = vcvt.s32.f32 %v628
          %v631 = vcvt.s32.f32 %v629
          %v632 = vsel %vm382, %v630, 0.0
          %v633 = vsel %vm382, %v631, 0.0
          %v634 = vadd.f32 %v632, %v633
          %v635 = vrot.slane %v634, 4
          %v636 = vadd.f32 %v634, %v635
          %v637 = vrot.slane %v636, 2
          %v638 = vadd.f32 %v636, %v637
          %v639 = vrot.slane %v638, 1
          %v640 = vadd.f32 %v638, %v639
          %vm641 = vcmask 122880
          %642 = vst.msk [vmem:[%s318] sm:$0x1] %vm641, %v627
          %643 = vst.msk [vmem:[%s324] sm:$0x1] %vm641, %v640
        $region52: #{tpu_custom_call.1} parent=31 // pred_fallthru
          _
        %s644 = sand.u32 %s128, 1
        %s645 = scalar_lea.sflag [#allocation6], %s644
        %s646 = sand.u32 %s128, 1
        %s647 = scalar_lea.vmem [#allocation10], %s646
        %s648 = sand.u32 %s154, 1
        %s649 = scalar_lea.sflag [#allocation12], %s648
        %s650 = sand.u32 %s154, 1
        %s651 = scalar_lea.vmem [#allocation11], %s650
        // Predicated region
        $region53: #{tpu_custom_call.1} parent=31 // pred_check
          %p652 = pneg %p138
        $region54: #{tpu_custom_call.1} parent=31 // pred_check_branch
          %654 = sbr.rel (%p652) target = $region56
        $region55: #{tpu_custom_call.1} parent=31 // pred_region
          %656 = vsyncadd %s645, 0
          %s657 = scalar_lea.hbm %s3, %s32
          %s659 = sshll.u32 %s647, 4
          %s660 = int_to_ptr.vmem [resolvable:$true] %s659
          %s661 = sshll.u32 %s657, 4
          %s662 = int_to_ptr.hbm [resolvable:$true] %s661
          %664 = dma.vmem_to_hbm [thread:$0]  %s660, 16, %s662, %s645
        $region56: #{tpu_custom_call.1} parent=31 // pred_fallthru
          _
        // Predicated region
        $region57: #{tpu_custom_call.1} parent=31 // pred_check
          %p665 = pneg %p164
        $region58: #{tpu_custom_call.1} parent=31 // pred_check_branch
          %667 = sbr.rel (%p665) target = $region60
        $region59: #{tpu_custom_call.1} parent=31 // pred_region
          %669 = vsyncadd %s649, 0
          %s670 = scalar_lea.hbm %s4, %s32
          %s672 = sshll.u32 %s651, 4
          %s673 = int_to_ptr.vmem [resolvable:$true] %s672
          %s674 = sshll.u32 %s670, 4
          %s675 = int_to_ptr.hbm [resolvable:$true] %s674
          %677 = dma.vmem_to_hbm [thread:$0]  %s673, 16, %s675, %s649
        $region60: #{tpu_custom_call.1} parent=31 // pred_fallthru
          _
      $region32: #{tpu_custom_call.1} parent=5 // pred_fallthru
        _
      %p678 = scmp.le.s32.totalorder 2, %s23
      // Predicated region
      $region61: #{tpu_custom_call.1} parent=5 // pred_check
        %p679 = pneg %p678
      $region62: #{tpu_custom_call.1} parent=5 // pred_check_branch
        %681 = sbr.rel (%p679) target = $region64
      $region63: #{tpu_custom_call.1} parent=5 // pred_region
        %s682 = ssub.s32 %s23, 2
        // Predicated region
        $region65: #{tpu_custom_call.1} parent=63 // pred_check
          %p683 = pneg %p144
        $region66: #{tpu_custom_call.1} parent=63 // pred_check_branch
          %685 = sbr.rel (%p683) target = $region68
        $region67: #{tpu_custom_call.1} parent=63 // pred_region
          %s686 = sand.u32 %s129, 1
          %s687 = scalar_lea.sflag [#allocation6], %s686
          %s688 = sand.u32 %s129, 1
          %s689 = scalar_lea.vmem [#allocation10], %s688
          %691 = dma.done %s687, 16
        $region68: #{tpu_custom_call.1} parent=63 // pred_fallthru
          _
        // Predicated region
        $region69: #{tpu_custom_call.1} parent=63 // pred_check
          %p692 = pneg %p170
        $region70: #{tpu_custom_call.1} parent=63 // pred_check_branch
          %694 = sbr.rel (%p692) target = $region72
        $region71: #{tpu_custom_call.1} parent=63 // pred_region
          %s695 = sand.u32 %s155, 1
          %s696 = scalar_lea.sflag [#allocation12], %s695
          %s697 = sand.u32 %s155, 1
          %s698 = scalar_lea.vmem [#allocation11], %s697
          %700 = dma.done %s696, 16
        $region72: #{tpu_custom_call.1} parent=63 // pred_fallthru
          _
      $region64: #{tpu_custom_call.1} parent=5 // pred_fallthru
        _
    $region6: #{tpu_custom_call.1} parent=1 // loop_footer
      %s27 = sadd.s32 1, %s23
    $region7: #{tpu_custom_call.1} parent=1 // loop_footer_branch
      %22 = sbr.rel target = $region3
    $region8: #{tpu_custom_call.1} parent=1 // loop_exit
      _
    %701 = vsyncpa [#allocation5], 1
    %s702 = scalar_lea.sflag [#allocation5], 1
    %703 = vsyncpa %s702, 1
    %704 = vsyncpa [#allocation8], 1
    %s705 = scalar_lea.sflag [#allocation8], 1
    %706 = vsyncpa %s705, 1
    %707 = vsyncpa [#allocation6], 1
    %s708 = scalar_lea.sflag [#allocation6], 1
    %709 = vsyncpa %s708, 1
    %710 = vsyncpa [#allocation12], 1
    %s711 = scalar_lea.sflag [#allocation12], 1
    %712 = vsyncpa %s711, 1

</llo_original>
